<compile_context>
chip_gen: v7x
topology: tpu7x:2x2x1
jax: 0.10.0
libtpu: 0.0.40
codegen_flags: <defaults>
</compile_context>

<pallas_src>
import jax
import jax.numpy as jnp
from jax.experimental import pallas as pl
from jax.experimental.pallas import tpu as pltpu

_LANE = 128
_MIN_KERNEL_ELEMS = 8 * _LANE  # below one full (8,128) tile -> plain XLA add


def _shortcut_add_kernel(a_ref, b_ref, o_ref):
    # Pure elementwise residual add on the VPU (memory-bound).
    o_ref[...] = a_ref[...] + b_ref[...]


def _choose_lanes(total: int) -> int:
    """Widest lane-dense last dim (multiple of 128) dividing `total` with >=8 rows."""
    for lanes in (4096, 2048, 1024, 512, 256, 128):
        if total % lanes == 0 and total // lanes >= 8:
            return lanes
    return _LANE


def _plan_tiles(rows_total: int, lanes: int, itemsize: int):
    """Generation-aware (tile_rows, vmem_limit_bytes)."""
    try:
        vmem_cap = int(getattr(pltpu.get_tpu_info(), "vmem_capacity_bytes",
                               64 * 1024 * 1024))
    except Exception:  # pragma: no cover - be robust to API drift
        vmem_cap = 64 * 1024 * 1024  # conservative (v7x-sized) default

    if vmem_cap <= 64 * 1024 * 1024:
        # v7x: 64 MiB physical VMEM per TC.  6 MiB tiles -> (2 in + 1 out) x 2
        # buffers = 36 MiB live, under a 48 MiB scoped limit with headroom.
        target_block_bytes = 6 * 1024 * 1024
        vmem_limit = 48 * 1024 * 1024
    else:
        # v5e / v6e: 128 MiB physical VMEM.  12 MiB tiles -> 72 MiB live.
        target_block_bytes = 12 * 1024 * 1024
        vmem_limit = 96 * 1024 * 1024

    # f32 packs 8 rows / vreg; bf16/int8/fp8 pack along sublanes -> align to 32
    # so the streaming vst path stays unmasked / relayout-free.
    align = 8 if itemsize >= 4 else 32

    tile_rows = max(align, target_block_bytes // (lanes * itemsize))
    tile_rows = (tile_rows // align) * align
    if tile_rows >= rows_total:
        # Single full-extent block (legal even when rows_total is not aligned).
        return rows_total, vmem_limit

    # v7x megacore: the grid axis is "parallel" (split across 2 TCs); nudge the
    # step count to an even number so neither core idles on an odd last step.
    steps = -(-rows_total // tile_rows)
    if steps > 1 and steps % 2 == 1:
        cand = -(-rows_total // (steps + 1))
        cand = -(-cand // align) * align
        if align <= cand < tile_rows:
            tile_rows = cand
    return tile_rows, vmem_limit


def shortcut_layer(outputs, source_layer: int):
    """Pallas equivalent of ShortcutLayer.forward(x, outputs).

    Returns outputs[-1] + outputs[source_layer].
    """
    a = outputs[-1]
    b = outputs[source_layer]
    assert a.shape == b.shape and a.dtype == b.dtype

    orig_shape = a.shape
    total = a.size
    itemsize = jnp.dtype(a.dtype).itemsize

    # Fallback: ragged (not 128-divisible) or tiny tensors.  XLA's fused
    # elementwise add is already HBM-roofline there, and for tiny feature maps
    # the pallas_call fixed cost would dominate.
    if total % _LANE != 0 or total < _MIN_KERNEL_ELEMS:
        return a + b

    lanes = _choose_lanes(total)
    rows_total = total // lanes
    a2 = a.reshape(rows_total, lanes)  # reshape of contiguous data: no copy
    b2 = b.reshape(rows_total, lanes)

    tile_rows, vmem_limit = _plan_tiles(rows_total, lanes, itemsize)
    grid = (-(-rows_total // tile_rows),)  # cdiv; partial last block is masked
    block = (tile_rows, lanes)

    cost = pl.CostEstimate(
        flops=total,
        transcendentals=0,
        bytes_accessed=3 * total * itemsize,  # read a, read b, write out
    )

    out2 = pl.pallas_call(
        _shortcut_add_kernel,
        out_shape=jax.ShapeDtypeStruct((rows_total, lanes), a.dtype),
        grid_spec=pltpu.PrefetchScalarGridSpec(
            num_scalar_prefetch=0,
            grid=grid,
            in_specs=[
                pl.BlockSpec(block, lambda i: (i, 0)),
                pl.BlockSpec(block, lambda i: (i, 0)),
            ],
            out_specs=pl.BlockSpec(block, lambda i: (i, 0)),
        ),
        compiler_params=pltpu.CompilerParams(
            # Shards the row-tile axis across TensorCores (helps v7x's 2 TCs).
            dimension_semantics=("parallel",),
            vmem_limit_bytes=vmem_limit,
        ),
        cost_estimate=cost,
        # TODO(synk): pass input_output_aliases={0: 0} (donate outputs[-1]) only
        # if the surrounding YOLO graph never re-reads it (route layers may).
    )(a2, b2)

    return out2.reshape(orig_shape)


if __name__ == "__main__":
    key = jax.random.PRNGKey(0)
    k0, k1, k2 = jax.random.split(key, 3)

    # Simulate a small stack of previous layer outputs (NCHW).
    n, c, h, w = 2, 4, 16, 16
    outputs = [
        jax.random.normal(k0, (n, c, h, w), dtype=jnp.float32),
        jax.random.normal(k1, (n, c, h, w), dtype=jnp.float32),
        jax.random.normal(k2, (n, c, h, w), dtype=jnp.float32),
    ]
    source_layer = 0  # ShortcutLayer(source_layer=0)

    out = shortcut_layer(outputs, source_layer)
    jax.block_until_ready(out)

    # Reference check against plain JAX.
    ref = outputs[-1] + outputs[source_layer]
    assert out.shape == ref.shape and out.dtype == ref.dtype
    assert jnp.allclose(out, ref), "mismatch vs reference add"

    print("KERNEL_OK")
</pallas_src>

<mosaic_0001>
module attributes {stable_mosaic.version = 11 : i64} {
  func.func @_shortcut_add_kernel(%arg0: i32, %arg1: memref<8x256xf32, #tpu.memory_space<vmem>>, %arg2: memref<8x256xf32, #tpu.memory_space<vmem>>, %arg3: memref<8x256xf32, #tpu.memory_space<vmem>>) attributes {dimension_semantics = [#tpu.dimension_semantics<parallel>], iteration_bounds = array<i64: 1>, scalar_prefetch = 0 : i64, scratch_operands = 0 : i64, tpu.core_type = #tpu.core_type<tc>, window_params = [{transform_indices = @transform_0, window_bounds = array<i64: 8, 256>}, {transform_indices = @transform_1, window_bounds = array<i64: 8, 256>}, {transform_indices = @transform_2, window_bounds = array<i64: 8, 256>}]} {
    %c0 = arith.constant 0 : index
    %c0_0 = arith.constant 0 : index
    %0 = vector.load %arg1[%c0, %c0_0] : memref<8x256xf32, #tpu.memory_space<vmem>>, vector<8x256xf32>
    %c0_1 = arith.constant 0 : index
    %c0_2 = arith.constant 0 : index
    %1 = vector.load %arg2[%c0_1, %c0_2] : memref<8x256xf32, #tpu.memory_space<vmem>>, vector<8x256xf32>
    %2 = arith.addf %0, %1 : vector<8x256xf32>
    %c0_3 = arith.constant 0 : index
    %c0_4 = arith.constant 0 : index
    %3 = vector.load %arg3[%c0_3, %c0_4] : memref<8x256xf32, #tpu.memory_space<vmem>>, vector<8x256xf32>
    tpu.vector_store %arg3[%c0_3, %c0_4], %2 {strides = array<i32>} : memref<8x256xf32, #tpu.memory_space<vmem>>, vector<8x256xf32>,
    return
  }
  func.func @transform_0(%arg0: i32) -> (i32, i32) {
    %c0_i32 = arith.constant 0 : i32
    %c0_i32_0 = arith.constant 0 : i32
    return %arg0, %c0_i32 : i32, i32
  }
  func.func @transform_1(%arg0: i32) -> (i32, i32) {
    %c0_i32 = arith.constant 0 : i32
    %c0_i32_0 = arith.constant 0 : i32
    return %arg0, %c0_i32 : i32, i32
  }
  func.func @transform_2(%arg0: i32) -> (i32, i32) {
    %c0_i32 = arith.constant 0 : i32
    %c0_i32_0 = arith.constant 0 : i32
    return %arg0, %c0_i32 : i32, i32
  }
}

</mosaic_0001>

<llo_original>
// kernel: tpu_custom_call.1
$region0: #{tpu_custom_call.1}
  #allocation0 [shape = 'u32[]', space=smem, size = 0x4, offset = 0x4, fixed_abs, tag = 'smem constant byte address 0x4 - core index']
  #allocation1 [shape = 'u32[144,128]{1,0:T(1,128)}', space=vmem, size = 0x12000, scoped, tag = 'internal scratch']
  %s0 = inlined_call_operand.hbm [shape: f32[8,256], index: 0, kind: input, shape index: {}]
  %s1 = inlined_call_operand.hbm [shape: f32[8,256], index: 1, kind: input, shape index: {}]
  %s2 = inlined_call_operand.hbm [shape: f32[8,256], index: 2, kind: output, shape index: {}]
  %s3 = sld [smem:[#allocation0]]
  $region26: #{tpu_custom_call.1} parent=0
    _
  %s5 = ssub.s32 1, %s3
  %s6 = scalar_select 0, %s5, %s3
  $region1: #{tpu_custom_call.1} parent=0
    #allocation2 [shape = 'u8[8192]{0}', space=vmem, size = 0x2000, scoped, tag = 'input window, operand 0, single buffered']
    #allocation3 [shape = 's32[1]{0}', space=sflag, size = 0x4, scoped, tag = 'scoped memory for tpu_custom_call.1']
    #allocation4 [shape = 's32[1]{0}', space=sflag, size = 0x4, scoped, tag = 'scoped memory for tpu_custom_call.1']
    #allocation5 [shape = 'u8[8192]{0}', space=vmem, size = 0x2000, scoped, tag = 'input window, operand 1, single buffered']
    #allocation6 [shape = 's32[1]{0}', space=sflag, size = 0x4, scoped, tag = 'scoped memory for tpu_custom_call.1']
    #allocation7 [shape = 'u8[8192]{0}', space=vmem, size = 0x2000, scoped, tag = 'output window, operand 0, single buffered']
    %7 = vsyncpa [#allocation3], 0
    %8 = vsyncpa [#allocation6], 0
    %9 = vsyncpa [#allocation4], 0
    // Predicated region
    $region2: #{tpu_custom_call.1} parent=1 // pred_check
      _
    $region3: #{tpu_custom_call.1} parent=1 // pred_check_branch
      %11 = sbr.rel (0) target = $region5
    $region4: #{tpu_custom_call.1} parent=1 // pred_region
      %s13 = ssub.s32 256, 256
      %14 = vsyncadd [#allocation3], %s13
      %s16 = sshll.u32 [#allocation2], 4
      %s17 = int_to_ptr.vmem [resolvable:$true] %s16
      %19 = dma.hbm_to_vmem [thread:$0]  %s0, 256, %s17, [#allocation3]
    $region5: #{tpu_custom_call.1} parent=1 // pred_fallthru
      _
    // Predicated region
    $region6: #{tpu_custom_call.1} parent=1 // pred_check
      _
    $region7: #{tpu_custom_call.1} parent=1 // pred_check_branch
      %21 = sbr.rel (0) target = $region9
    $region8: #{tpu_custom_call.1} parent=1 // pred_region
      %s23 = ssub.s32 256, 256
      %24 = vsyncadd [#allocation6], %s23
      %s26 = sshll.u32 [#allocation5], 4
      %s27 = int_to_ptr.vmem [resolvable:$true] %s26
      %29 = dma.hbm_to_vmem [thread:$0]  %s1, 256, %s27, [#allocation6]
    $region9: #{tpu_custom_call.1} parent=1 // pred_fallthru
      _
    // Predicated region
    $region10: #{tpu_custom_call.1} parent=1 // pred_check
      _
    $region11: #{tpu_custom_call.1} parent=1 // pred_check_branch
      %31 = sbr.rel (0) target = $region13
    $region12: #{tpu_custom_call.1} parent=1 // pred_region
      %32 = dma.done [#allocation3], 256
    $region13: #{tpu_custom_call.1} parent=1 // pred_fallthru
      _
    // Predicated region
    $region14: #{tpu_custom_call.1} parent=1 // pred_check
      _
    $region15: #{tpu_custom_call.1} parent=1 // pred_check_branch
      %34 = sbr.rel (0) target = $region17
    $region16: #{tpu_custom_call.1} parent=1 // pred_region
      %35 = dma.done [#allocation6], 256
    $region17: #{tpu_custom_call.1} parent=1 // pred_fallthru
      _
    %v36 = vld [vmem:[#allocation2] sm:$0xff]
    %v37 = vld [vmem:[#allocation2 + $0x8] sm:$0xff]
    %v38 = vld [vmem:[#allocation5] sm:$0xff]
    %v39 = vld [vmem:[#allocation5 + $0x8] sm:$0xff]
    %v40 = vadd.f32 %v36, %v38
    %v41 = vadd.f32 %v37, %v39
    %42 = vst [vmem:[#allocation7] sm:$0xff] %v40
    %43 = vst [vmem:[#allocation7 + $0x8] sm:$0xff] %v41
    // Predicated region
    $region18: #{tpu_custom_call.1} parent=1 // pred_check
      _
    $region19: #{tpu_custom_call.1} parent=1 // pred_check_branch
      %45 = sbr.rel (0) target = $region21
    $region20: #{tpu_custom_call.1} parent=1 // pred_region
      %s47 = ssub.s32 256, 256
      %48 = vsyncadd [#allocation4], %s47
      %s50 = sshll.u32 [#allocation7], 4
      %s51 = int_to_ptr.vmem [resolvable:$true] %s50
      %53 = dma.vmem_to_hbm [thread:$0]  %s51, 256, %s2, [#allocation4]
    $region21: #{tpu_custom_call.1} parent=1 // pred_fallthru
      _
    // Predicated region
    $region22: #{tpu_custom_call.1} parent=1 // pred_check
      _
    $region23: #{tpu_custom_call.1} parent=1 // pred_check_branch
      %55 = sbr.rel (0) target = $region25
    $region24: #{tpu_custom_call.1} parent=1 // pred_region
      %56 = dma.done [#allocation4], 256
    $region25: #{tpu_custom_call.1} parent=1 // pred_fallthru
      _
    %57 = vsyncpa [#allocation3], 1
    %58 = vsyncpa [#allocation6], 1
    %59 = vsyncpa [#allocation4], 1

</llo_original>
